<compile_context>
chip_gen: v7x
topology: tpu7x:2x2x1
jax: 0.10.0
libtpu: 0.0.40
codegen_flags: <defaults>
</compile_context>

<pallas_src>
import math
import functools

import jax
import jax.numpy as jnp
from jax.experimental import pallas as pl
from jax.experimental.pallas import tpu as pltpu


def _conv3_bn(x_f32, w_ref, b_ref, layer):
    """k=3, pad=1 Conv1d with BN folded in. x_f32: (L, Cin) f32.

    w_ref[layer]: (3*Cin, Cout) bf16 (rows ordered tap0|tap1|tap2),
    b_ref[layer]: (1, Cout) f32. Returns (L, Cout) f32.
    """
    xb = x_f32.astype(jnp.bfloat16)
    cin = xb.shape[1]
    zero = jnp.zeros((1, cin), jnp.bfloat16)
    x_prev = jnp.concatenate([zero, xb[:-1, :]], axis=0)   # x[l-1]  (tap 0)
    x_next = jnp.concatenate([xb[1:, :], zero], axis=0)    # x[l+1]  (tap 2)
    x_cat = jnp.concatenate([x_prev, xb, x_next], axis=-1)  # (L, 3*Cin)
    return (jnp.dot(x_cat, w_ref[layer], preferred_element_type=jnp.float32)
            + b_ref[layer])


def _resnet1d_kernel(x_ref, w1_ref, b1_ref, w2_ref, b2_ref, out_ref, *, num_layers):
    """One batch element per grid step; full (L, C) slab in VMEM; static layer loop."""
    x = x_ref[0].astype(jnp.float32)                 # (L, C)
    for layer in range(num_layers):                  # static unroll (num_layers small)
        identity = x
        h = jnp.maximum(_conv3_bn(x, w1_ref, b1_ref, layer), 0.0)   # conv1+BN1+ReLU
        y = _conv3_bn(h, w2_ref, b2_ref, layer)                     # conv2+BN2
        x = jnp.maximum(y + identity, 0.0)                          # residual + ReLU
    out_ref[0] = x.astype(out_ref.dtype)


def resnet1d_forward(x, layer_params, *, eps=1e-5):
    """x: (B, L, input_dim).  layer_params: list (per layer) of
    (w1, b1, g1, beta1, mean1, var1, w2, b2, g2, beta2, mean2, var2)
    with conv weights in the PyTorch (Cout, Cin, 3) layout. Returns (B, L, input_dim).
    """
    B, L, C = x.shape
    num_layers = len(layer_params)
    H = layer_params[0][0].shape[0]          # hidden_dim

    def fold(w, b, gamma, beta, mean, var):
        # Fold eval-mode BN into the conv:  y = conv(x; w*scale) + (b - mean)*scale + beta
        scale = gamma / jnp.sqrt(var + eps)                              # (Cout,)
        w_taps = jnp.transpose(w, (2, 1, 0)) * scale[None, None, :]      # (3, Cin, Cout)
        w_stack = w_taps.reshape(3 * w.shape[1], w.shape[0])             # (3*Cin, Cout)
        b_f = (b - mean) * scale + beta                                  # (Cout,)
        return w_stack, b_f

    w1s, b1s, w2s, b2s = [], [], [], []
    for (w1, b1, g1, be1, m1, v1, w2, b2, g2, be2, m2, v2) in layer_params:
        ws, bs = fold(w1, b1, g1, be1, m1, v1); w1s.append(ws); b1s.append(bs)
        ws, bs = fold(w2, b2, g2, be2, m2, v2); w2s.append(ws); b2s.append(bs)

    w1_all = jnp.stack(w1s).astype(jnp.bfloat16)                 # (NL, 3*C, H)
    b1_all = jnp.stack(b1s)[:, None, :].astype(jnp.float32)      # (NL, 1, H)
    w2_all = jnp.stack(w2s).astype(jnp.bfloat16)                 # (NL, 3*H, C)
    b2_all = jnp.stack(b2s)[:, None, :].astype(jnp.float32)      # (NL, 1, C)

    kernel = functools.partial(_resnet1d_kernel, num_layers=num_layers)

    def const_spec(shape):
        nd = len(shape)
        return pl.BlockSpec(shape, lambda b, _nd=nd: (0,) * _nd)

    return pl.pallas_call(
        kernel,
        out_shape=jax.ShapeDtypeStruct((B, L, C), x.dtype),
        grid_spec=pltpu.PrefetchScalarGridSpec(
            num_scalar_prefetch=0,
            grid=(B,),
            in_specs=[
                pl.BlockSpec((1, L, C), lambda b: (b, 0, 0)),      # x (one batch elem)
                const_spec((num_layers, 3 * C, H)),                # folded conv1 weights
                const_spec((num_layers, 1, H)),                    # folded conv1 bias
                const_spec((num_layers, 3 * H, C)),                # folded conv2 weights
                const_spec((num_layers, 1, C)),                    # folded conv2 bias
            ],
            out_specs=pl.BlockSpec((1, L, C), lambda b: (b, 0, 0)),
        ),
        compiler_params=pltpu.CompilerParams(dimension_semantics=("parallel",)),
    )(x, w1_all, b1_all, w2_all, b2_all)


# ----------------------------- pure-JAX reference -----------------------------

def _ref_conv1d(x, w, b):
    """x: (B, L, Cin) feature-last; w: (Cout, Cin, 3) PyTorch layout; padding=1."""
    B, L, _ = x.shape
    xp = jnp.pad(x, ((0, 0), (1, 1), (0, 0)))
    out = jnp.broadcast_to(b, (B, L, w.shape[0])).astype(jnp.float32)
    for k in range(3):
        out = out + jnp.einsum('blc,oc->blo', xp[:, k:k + L, :], w[:, :, k])
    return out


def _ref_bn(x, gamma, beta, mean, var, eps):
    return (x - mean) / jnp.sqrt(var + eps) * gamma + beta


def _reference(x, layer_params, eps=1e-5):
    out = x
    for (w1, b1, g1, be1, m1, v1, w2, b2, g2, be2, m2, v2) in layer_params:
        identity = out
        h = jnp.maximum(_ref_bn(_ref_conv1d(out, w1, b1), g1, be1, m1, v1, eps), 0.0)
        y = _ref_bn(_ref_conv1d(h, w2, b2), g2, be2, m2, v2, eps)
        out = jnp.maximum(y + identity, 0.0)
    return out


if __name__ == "__main__":
    B, L = 2, 16
    input_dim, hidden_dim, num_layers = 32, 32, 2

    key = jax.random.PRNGKey(0)
    keys = jax.random.split(key, 1 + num_layers)
    x = jax.random.normal(keys[0], (B, L, input_dim), jnp.float32)

    def conv_init(kw, kb, cout, cin, k=3):
        bound = 1.0 / math.sqrt(cin * k)
        w = jax.random.uniform(kw, (cout, cin, k), jnp.float32, -bound, bound)
        b = jax.random.uniform(kb, (cout,), jnp.float32, -bound, bound)
        return w, b

    def bn_init(kg, kb, km, kv, c):
        gamma = jax.random.uniform(kg, (c,), jnp.float32, 0.5, 1.5)
        beta = 0.1 * jax.random.normal(kb, (c,), jnp.float32)
        mean = 0.1 * jax.random.normal(km, (c,), jnp.float32)
        var = jax.random.uniform(kv, (c,), jnp.float32, 0.5, 1.5)
        return gamma, beta, mean, var

    layer_params = []
    for i in range(num_layers):
        lk = jax.random.split(keys[1 + i], 12)
        w1, b1 = conv_init(lk[0], lk[1], hidden_dim, input_dim)
        g1, be1, m1, v1 = bn_init(lk[2], lk[3], lk[4], lk[5], hidden_dim)
        w2, b2 = conv_init(lk[6], lk[7], input_dim, hidden_dim)
        g2, be2, m2, v2 = bn_init(lk[8], lk[9], lk[10], lk[11], input_dim)
        layer_params.append((w1, b1, g1, be1, m1, v1, w2, b2, g2, be2, m2, v2))

    out = resnet1d_forward(x, layer_params)
    out = jax.block_until_ready(out)

    ref = _reference(x, layer_params)
    assert out.shape == (B, L, input_dim), out.shape
    max_err = float(jnp.max(jnp.abs(out - ref)))
    # bf16 matmul operands (f32 accumulation) -> loosened tolerance vs pure-f32 ref.
    assert max_err < 5e-2, f"max abs err {max_err}"

    print("KERNEL_OK")
</pallas_src>

<mosaic_0001>
module attributes {stable_mosaic.version = 11 : i64} {
  func.func @_resnet1d_kernel(%arg0: i32, %arg1: memref<1x16x32xf32, #tpu.memory_space<vmem>>, %arg2: memref<2x96x32xbf16, #tpu.memory_space<vmem>>, %arg3: memref<2x1x32xf32, #tpu.memory_space<vmem>>, %arg4: memref<2x96x32xbf16, #tpu.memory_space<vmem>>, %arg5: memref<2x1x32xf32, #tpu.memory_space<vmem>>, %arg6: memref<1x16x32xf32, #tpu.memory_space<vmem>>) attributes {dimension_semantics = [#tpu.dimension_semantics<parallel>], iteration_bounds = array<i64: 2>, scalar_prefetch = 0 : i64, scratch_operands = 0 : i64, tpu.core_type = #tpu.core_type<tc>, window_params = [{transform_indices = @transform_0, window_bounds = array<i64: 1, 16, 32>}, {pipeline_mode = #tpu.pipeline_mode<synchronous>, transform_indices = @transform_1, window_bounds = array<i64: 2, 96, 32>}, {pipeline_mode = #tpu.pipeline_mode<synchronous>, transform_indices = @transform_2, window_bounds = array<i64: 2, 1, 32>}, {pipeline_mode = #tpu.pipeline_mode<synchronous>, transform_indices = @transform_3, window_bounds = array<i64: 2, 96, 32>}, {pipeline_mode = #tpu.pipeline_mode<synchronous>, transform_indices = @transform_4, window_bounds = array<i64: 2, 1, 32>}, {transform_indices = @transform_5, window_bounds = array<i64: 1, 16, 32>}]} {
    %c0 = arith.constant 0 : index
    %c0_0 = arith.constant 0 : index
    %c0_1 = arith.constant 0 : index
    %0 = vector.load %arg1[%c0, %c0_0, %c0_1] : memref<1x16x32xf32, #tpu.memory_space<vmem>>, vector<1x16x32xf32>
    %1 = vector.shape_cast %0 : vector<1x16x32xf32> to vector<16x32xf32>
    %2 = arith.truncf %1 : vector<16x32xf32> to vector<16x32xbf16>
    %cst = arith.constant 0.000000e+00 : bf16
    %3 = vector.broadcast %cst : bf16 to vector<1x32xbf16>
    %4 = vector.extract_strided_slice %2 {offsets = [0, 0], sizes = [15, 32], strides = [1, 1]} : vector<16x32xbf16> to vector<15x32xbf16>
    %5 = tpu.concatenate %3, %4 in 0 : vector<1x32xbf16>, vector<15x32xbf16> -> vector<16x32xbf16>
    %6 = vector.extract_strided_slice %2 {offsets = [1, 0], sizes = [15, 32], strides = [1, 1]} : vector<16x32xbf16> to vector<15x32xbf16>
    %7 = tpu.concatenate %6, %3 in 0 : vector<15x32xbf16>, vector<1x32xbf16> -> vector<16x32xbf16>
    %8 = tpu.concatenate %5, %2, %7 in 1 : vector<16x32xbf16>, vector<16x32xbf16>, vector<16x32xbf16> -> vector<16x96xbf16>
    %c0_2 = arith.constant 0 : index
    %c0_3 = arith.constant 0 : index
    %c0_4 = arith.constant 0 : index
    %9 = vector.load %arg2[%c0_2, %c0_3, %c0_4] : memref<2x96x32xbf16, #tpu.memory_space<vmem>>, vector<1x96x32xbf16>
    %10 = vector.shape_cast %9 : vector<1x96x32xbf16> to vector<96x32xbf16>
    %cst_5 = arith.constant dense<0.000000e+00> : vector<16x32xf32>
    %11 = tpu.matmul %8, %10, %cst_5 {dimension_numbers = #tpu.dot_dimension_numbers<[1], [0], [0], [1], [0, 0, 1, 1], [], []>} : vector<16x96xbf16>, vector<96x32xbf16>, vector<16x32xf32> -> vector<16x32xf32>
    %c0_6 = arith.constant 0 : index
    %c0_7 = arith.constant 0 : index
    %c0_8 = arith.constant 0 : index
    %12 = vector.load %arg3[%c0_6, %c0_7, %c0_8] : memref<2x1x32xf32, #tpu.memory_space<vmem>>, vector<1x1x32xf32>
    %13 = vector.shape_cast %12 : vector<1x1x32xf32> to vector<1x32xf32>
    %14 = vector.broadcast %13 : vector<1x32xf32> to vector<16x32xf32>
    %15 = arith.addf %11, %14 : vector<16x32xf32>
    %cst_9 = arith.constant 0.000000e+00 : f32
    %16 = vector.broadcast %cst_9 : f32 to vector<16x32xf32>
    %17 = arith.maximumf %15, %16 : vector<16x32xf32>
    %18 = arith.truncf %17 : vector<16x32xf32> to vector<16x32xbf16>
    %cst_10 = arith.constant 0.000000e+00 : bf16
    %19 = vector.broadcast %cst_10 : bf16 to vector<1x32xbf16>
    %20 = vector.extract_strided_slice %18 {offsets = [0, 0], sizes = [15, 32], strides = [1, 1]} : vector<16x32xbf16> to vector<15x32xbf16>
    %21 = tpu.concatenate %19, %20 in 0 : vector<1x32xbf16>, vector<15x32xbf16> -> vector<16x32xbf16>
    %22 = vector.extract_strided_slice %18 {offsets = [1, 0], sizes = [15, 32], strides = [1, 1]} : vector<16x32xbf16> to vector<15x32xbf16>
    %23 = tpu.concatenate %22, %19 in 0 : vector<15x32xbf16>, vector<1x32xbf16> -> vector<16x32xbf16>
    %24 = tpu.concatenate %21, %18, %23 in 1 : vector<16x32xbf16>, vector<16x32xbf16>, vector<16x32xbf16> -> vector<16x96xbf16>
    %c0_11 = arith.constant 0 : index
    %c0_12 = arith.constant 0 : index
    %c0_13 = arith.constant 0 : index
    %25 = vector.load %arg4[%c0_11, %c0_12, %c0_13] : memref<2x96x32xbf16, #tpu.memory_space<vmem>>, vector<1x96x32xbf16>
    %26 = vector.shape_cast %25 : vector<1x96x32xbf16> to vector<96x32xbf16>
    %cst_14 = arith.constant dense<0.000000e+00> : vector<16x32xf32>
    %27 = tpu.matmul %24, %26, %cst_14 {dimension_numbers = #tpu.dot_dimension_numbers<[1], [0], [0], [1], [0, 0, 1, 1], [], []>} : vector<16x96xbf16>, vector<96x32xbf16>, vector<16x32xf32> -> vector<16x32xf32>
    %c0_15 = arith.constant 0 : index
    %c0_16 = arith.constant 0 : index
    %c0_17 = arith.constant 0 : index
    %28 = vector.load %arg5[%c0_15, %c0_16, %c0_17] : memref<2x1x32xf32, #tpu.memory_space<vmem>>, vector<1x1x32xf32>
    %29 = vector.shape_cast %28 : vector<1x1x32xf32> to vector<1x32xf32>
    %30 = vector.broadcast %29 : vector<1x32xf32> to vector<16x32xf32>
    %31 = arith.addf %27, %30 : vector<16x32xf32>
    %32 = arith.addf %31, %1 : vector<16x32xf32>
    %cst_18 = arith.constant 0.000000e+00 : f32
    %33 = vector.broadcast %cst_18 : f32 to vector<16x32xf32>
    %34 = arith.maximumf %32, %33 : vector<16x32xf32>
    %35 = arith.truncf %34 : vector<16x32xf32> to vector<16x32xbf16>
    %cst_19 = arith.constant 0.000000e+00 : bf16
    %36 = vector.broadcast %cst_19 : bf16 to vector<1x32xbf16>
    %37 = vector.extract_strided_slice %35 {offsets = [0, 0], sizes = [15, 32], strides = [1, 1]} : vector<16x32xbf16> to vector<15x32xbf16>
    %38 = tpu.concatenate %36, %37 in 0 : vector<1x32xbf16>, vector<15x32xbf16> -> vector<16x32xbf16>
    %39 = vector.extract_strided_slice %35 {offsets = [1, 0], sizes = [15, 32], strides = [1, 1]} : vector<16x32xbf16> to vector<15x32xbf16>
    %40 = tpu.concatenate %39, %36 in 0 : vector<15x32xbf16>, vector<1x32xbf16> -> vector<16x32xbf16>
    %41 = tpu.concatenate %38, %35, %40 in 1 : vector<16x32xbf16>, vector<16x32xbf16>, vector<16x32xbf16> -> vector<16x96xbf16>
    %c1 = arith.constant 1 : index
    %c0_20 = arith.constant 0 : index
    %c0_21 = arith.constant 0 : index
    %42 = vector.load %arg2[%c1, %c0_20, %c0_21] : memref<2x96x32xbf16, #tpu.memory_space<vmem>>, vector<1x96x32xbf16>
    %43 = vector.shape_cast %42 : vector<1x96x32xbf16> to vector<96x32xbf16>
    %cst_22 = arith.constant dense<0.000000e+00> : vector<16x32xf32>
    %44 = tpu.matmul %41, %43, %cst_22 {dimension_numbers = #tpu.dot_dimension_numbers<[1], [0], [0], [1], [0, 0, 1, 1], [], []>} : vector<16x96xbf16>, vector<96x32xbf16>, vector<16x32xf32> -> vector<16x32xf32>
    %c1_23 = arith.constant 1 : index
    %c0_24 = arith.constant 0 : index
    %c0_25 = arith.constant 0 : index
    %45 = vector.load %arg3[%c1_23, %c0_24, %c0_25] : memref<2x1x32xf32, #tpu.memory_space<vmem>>, vector<1x1x32xf32>
    %46 = vector.shape_cast %45 : vector<1x1x32xf32> to vector<1x32xf32>
    %47 = vector.broadcast %46 : vector<1x32xf32> to vector<16x32xf32>
    %48 = arith.addf %44, %47 : vector<16x32xf32>
    %cst_26 = arith.constant 0.000000e+00 : f32
    %49 = vector.broadcast %cst_26 : f32 to vector<16x32xf32>
    %50 = arith.maximumf %48, %49 : vector<16x32xf32>
    %51 = arith.truncf %50 : vector<16x32xf32> to vector<16x32xbf16>
    %cst_27 = arith.constant 0.000000e+00 : bf16
    %52 = vector.broadcast %cst_27 : bf16 to vector<1x32xbf16>
    %53 = vector.extract_strided_slice %51 {offsets = [0, 0], sizes = [15, 32], strides = [1, 1]} : vector<16x32xbf16> to vector<15x32xbf16>
    %54 = tpu.concatenate %52, %53 in 0 : vector<1x32xbf16>, vector<15x32xbf16> -> vector<16x32xbf16>
    %55 = vector.extract_strided_slice %51 {offsets = [1, 0], sizes = [15, 32], strides = [1, 1]} : vector<16x32xbf16> to vector<15x32xbf16>
    %56 = tpu.concatenate %55, %52 in 0 : vector<15x32xbf16>, vector<1x32xbf16> -> vector<16x32xbf16>
    %57 = tpu.concatenate %54, %51, %56 in 1 : vector<16x32xbf16>, vector<16x32xbf16>, vector<16x32xbf16> -> vector<16x96xbf16>
    %c1_28 = arith.constant 1 : index
    %c0_29 = arith.constant 0 : index
    %c0_30 = arith.constant 0 : index
    %58 = vector.load %arg4[%c1_28, %c0_29, %c0_30] : memref<2x96x32xbf16, #tpu.memory_space<vmem>>, vector<1x96x32xbf16>
    %59 = vector.shape_cast %58 : vector<1x96x32xbf16> to vector<96x32xbf16>
    %cst_31 = arith.constant dense<0.000000e+00> : vector<16x32xf32>
    %60 = tpu.matmul %57, %59, %cst_31 {dimension_numbers = #tpu.dot_dimension_numbers<[1], [0], [0], [1], [0, 0, 1, 1], [], []>} : vector<16x96xbf16>, vector<96x32xbf16>, vector<16x32xf32> -> vector<16x32xf32>
    %c1_32 = arith.constant 1 : index
    %c0_33 = arith.constant 0 : index
    %c0_34 = arith.constant 0 : index
    %61 = vector.load %arg5[%c1_32, %c0_33, %c0_34] : memref<2x1x32xf32, #tpu.memory_space<vmem>>, vector<1x1x32xf32>
    %62 = vector.shape_cast %61 : vector<1x1x32xf32> to vector<1x32xf32>
    %63 = vector.broadcast %62 : vector<1x32xf32> to vector<16x32xf32>
    %64 = arith.addf %60, %63 : vector<16x32xf32>
    %65 = arith.addf %64, %34 : vector<16x32xf32>
    %cst_35 = arith.constant 0.000000e+00 : f32
    %66 = vector.broadcast %cst_35 : f32 to vector<16x32xf32>
    %67 = arith.maximumf %65, %66 : vector<16x32xf32>
    %c0_36 = arith.constant 0 : index
    %c0_37 = arith.constant 0 : index
    %c0_38 = arith.constant 0 : index
    %68 = vector.load %arg6[%c0_36, %c0_37, %c0_38] : memref<1x16x32xf32, #tpu.memory_space<vmem>>, vector<1x16x32xf32>
    %69 = vector.shape_cast %68 : vector<1x16x32xf32> to vector<16x32xf32>
    %70 = vector.shape_cast %67 : vector<16x32xf32> to vector<1x16x32xf32>
    tpu.vector_store %arg6[%c0_36, %c0_37, %c0_38], %70 {strides = array<i32>} : memref<1x16x32xf32, #tpu.memory_space<vmem>>, vector<1x16x32xf32>,
    return
  }
  func.func @transform_0(%arg0: i32) -> (i32, i32, i32) {
    %c0_i32 = arith.constant 0 : i32
    %c0_i32_0 = arith.constant 0 : i32
    %c0_i32_1 = arith.constant 0 : i32
    return %arg0, %c0_i32, %c0_i32_0 : i32, i32, i32
  }
  func.func @transform_1(%arg0: i32) -> (i32, i32, i32) {
    %c0_i32 = arith.constant 0 : i32
    %c0_i32_0 = arith.constant 0 : i32
    %c0_i32_1 = arith.constant 0 : i32
    %c0_i32_2 = arith.constant 0 : i32
    return %c0_i32, %c0_i32_0, %c0_i32_1 : i32, i32, i32
  }
  func.func @transform_2(%arg0: i32) -> (i32, i32, i32) {
    %c0_i32 = arith.constant 0 : i32
    %c0_i32_0 = arith.constant 0 : i32
    %c0_i32_1 = arith.constant 0 : i32
    %c0_i32_2 = arith.constant 0 : i32
    return %c0_i32, %c0_i32_0, %c0_i32_1 : i32, i32, i32
  }
  func.func @transform_3(%arg0: i32) -> (i32, i32, i32) {
    %c0_i32 = arith.constant 0 : i32
    %c0_i32_0 = arith.constant 0 : i32
    %c0_i32_1 = arith.constant 0 : i32
    %c0_i32_2 = arith.constant 0 : i32
    return %c0_i32, %c0_i32_0, %c0_i32_1 : i32, i32, i32
  }
  func.func @transform_4(%arg0: i32) -> (i32, i32, i32) {
    %c0_i32 = arith.constant 0 : i32
    %c0_i32_0 = arith.constant 0 : i32
    %c0_i32_1 = arith.constant 0 : i32
    %c0_i32_2 = arith.constant 0 : i32
    return %c0_i32, %c0_i32_0, %c0_i32_1 : i32, i32, i32
  }
  func.func @transform_5(%arg0: i32) -> (i32, i32, i32) {
    %c0_i32 = arith.constant 0 : i32
    %c0_i32_0 = arith.constant 0 : i32
    %c0_i32_1 = arith.constant 0 : i32
    return %arg0, %c0_i32, %c0_i32_0 : i32, i32, i32
  }
}

</mosaic_0001>

<llo_original>
// kernel: tpu_custom_call.1
$region0: #{tpu_custom_call.1}
  #allocation0 [shape = 'u32[]', space=smem, size = 0x4, offset = 0x4, fixed_abs, tag = 'smem constant byte address 0x4 - core index']
  #allocation1 [shape = 'u32[144,128]{1,0:T(1,128)}', space=vmem, size = 0x12000, scoped, tag = 'internal scratch']
  %s0 = inlined_call_operand.vmem [shape: f32[2,16,32], index: 0, kind: input, shape index: {}]
  %s1 = inlined_call_operand.vmem [shape: bf16[2,96,32], index: 1, kind: input, shape index: {}]
  %s2 = inlined_call_operand.vmem [shape: f32[2,1,32], index: 2, kind: input, shape index: {}]
  %s3 = inlined_call_operand.vmem [shape: bf16[2,96,32], index: 3, kind: input, shape index: {}]
  %s4 = inlined_call_operand.vmem [shape: f32[2,1,32], index: 4, kind: input, shape index: {}]
  %s5 = inlined_call_operand.hbm [shape: f32[2,16,32], index: 5, kind: output, shape index: {}]
  %s6 = sld [smem:[#allocation0]]
  $region53: #{tpu_custom_call.1} parent=0
    _
  %s8 = ssub.s32 1, %s6
  %s9 = scalar_select 0, %s8, %s6
  $region1: #{tpu_custom_call.1} parent=0
    #allocation2 [shape = 'u8[16384]{0}', space=vmem, size = 0x4000, scoped, tag = 'output window, operand 0']
    #allocation3 [shape = 's32[2]{0}', space=sflag, size = 0x8, scoped, tag = 'scoped memory for tpu_custom_call.1']
    %10 = vsyncpa [#allocation3], 0
    %s11 = scalar_lea.sflag [#allocation3], 1
    %12 = vsyncpa %s11, 0
    loop: start=0, step=1, limit=4
    $region2: #{tpu_custom_call.1} parent=1 // loop_pre_header
      _
    $region3: #{tpu_custom_call.1} parent=1 // loop_header
      %s14 = sphi 0, %s18
      %p15 = scmp.ge.s32.totalorder %s14, 4
      %s24 = sphi 0, %s26
      %s27 = sphi 0, %s24
      %s28 = sphi 0, %s27
      %s44 = sphi 0, %s28
      %s48 = sphi 0, %s48
      %s50 = sphi 0, %s48
      %s51 = sphi 0, %s50
      %s65 = sphi 0, %s51
      %s69 = sphi 0, %s69
      %s71 = sphi 0, %s69
      %s72 = sphi 0, %s71
      %s86 = sphi 0, %s72
      %s90 = sphi 0, %s90
      %s92 = sphi 0, %s90
      %s93 = sphi 0, %s92
      %s107 = sphi 0, %s93
      %s111 = sphi 0, %s111
      %s113 = sphi 0, %s111
      %s114 = sphi 0, %s113
      %s128 = sphi 0, %s114
      %s134 = sphi 0, %s136
      %s137 = sphi 0, %s134
      %s138 = sphi 0, %s137
      %s154 = sphi 0, %s138
    $region4: #{tpu_custom_call.1} parent=1 // loop_header_branch
      %17 = sbr.rel (%p15) target = $region8
    $region5: #{tpu_custom_call.1} parent=1 // loop_body
      %s19 = ssub.s32 %s14, 1
      %s20 = ssub.s32 %s14, 2
      %s21 = sadd.s32 %s14, 1
      %s22 = ssub.s32 %s14, %s21
      %p23 = scmp.eq.s32.totalorder %s22, 0
      %s25 = sadd.s32 %s24, 1
      %s26 = scalar_select %p23, %s24, %s25
      %p29 = pneg %p23
      %p30 = scmp.eq.s32.totalorder %s14, 1
      %p31 = por %p29, %p30
      %p32 = scmp.ne.s32.totalorder %s24, %s27
      %p33 = scmp.eq.s32.totalorder %s14, 0
      %p34 = por %p32, %p33
      %p35 = scmp.ne.s32.totalorder %s24, %s27
      %p36 = scmp.eq.s32.totalorder %s19, 1
      %p37 = por %p35, %p36
      %p38 = scmp.ne.s32.totalorder %s27, %s28
      %p39 = scmp.eq.s32.totalorder %s19, 0
      %p40 = por %p38, %p39
      %p41 = scmp.ne.s32.totalorder %s27, %s28
      %p42 = scmp.eq.s32.totalorder %s20, 1
      %p43 = por %p41, %p42
      %p45 = scmp.ne.s32.totalorder %s28, %s44
      %p46 = scmp.eq.s32.totalorder %s20, 0
      %p47 = por %p45, %p46
      %s49 = sadd.s32 %s48, 1
      %p52 = scmp.eq.s32.totalorder %s14, 1
      %p53 = scmp.ne.s32.totalorder %s48, %s50
      %p54 = scmp.eq.s32.totalorder %s14, 0
      %p55 = por %p53, %p54
      %p56 = scmp.ne.s32.totalorder %s48, %s50
      %p57 = scmp.eq.s32.totalorder %s19, 1
      %p58 = por %p56, %p57
      %p59 = scmp.ne.s32.totalorder %s50, %s51
      %p60 = scmp.eq.s32.totalorder %s19, 0
      %p61 = por %p59, %p60
      %p62 = scmp.ne.s32.totalorder %s50, %s51
      %p63 = scmp.eq.s32.totalorder %s20, 1
      %p64 = por %p62, %p63
      %p66 = scmp.ne.s32.totalorder %s51, %s65
      %p67 = scmp.eq.s32.totalorder %s20, 0
      %p68 = por %p66, %p67
      %s70 = sadd.s32 %s69, 1
      %p73 = scmp.eq.s32.totalorder %s14, 1
      %p74 = scmp.ne.s32.totalorder %s69, %s71
      %p75 = scmp.eq.s32.totalorder %s14, 0
      %p76 = por %p74, %p75
      %p77 = scmp.ne.s32.totalorder %s69, %s71
      %p78 = scmp.eq.s32.totalorder %s19, 1
      %p79 = por %p77, %p78
      %p80 = scmp.ne.s32.totalorder %s71, %s72
      %p81 = scmp.eq.s32.totalorder %s19, 0
      %p82 = por %p80, %p81
      %p83 = scmp.ne.s32.totalorder %s71, %s72
      %p84 = scmp.eq.s32.totalorder %s20, 1
      %p85 = por %p83, %p84
      %p87 = scmp.ne.s32.totalorder %s72, %s86
      %p88 = scmp.eq.s32.totalorder %s20, 0
      %p89 = por %p87, %p88
      %s91 = sadd.s32 %s90, 1
      %p94 = scmp.eq.s32.totalorder %s14, 1
      %p95 = scmp.ne.s32.totalorder %s90, %s92
      %p96 = scmp.eq.s32.totalorder %s14, 0
      %p97 = por %p95, %p96
      %p98 = scmp.ne.s32.totalorder %s90, %s92
      %p99 = scmp.eq.s32.totalorder %s19, 1
      %p100 = por %p98, %p99
      %p101 = scmp.ne.s32.totalorder %s92, %s93
      %p102 = scmp.eq.s32.totalorder %s19, 0
      %p103 = por %p101, %p102
      %p104 = scmp.ne.s32.totalorder %s92, %s93
      %p105 = scmp.eq.s32.totalorder %s20, 1
      %p106 = por %p104, %p105
      %p108 = scmp.ne.s32.totalorder %s93, %s107
      %p109 = scmp.eq.s32.totalorder %s20, 0
      %p110 = por %p108, %p109
      %s112 = sadd.s32 %s111, 1
      %p115 = scmp.eq.s32.totalorder %s14, 1
      %p116 = scmp.ne.s32.totalorder %s111, %s113
      %p117 = scmp.eq.s32.totalorder %s14, 0
      %p118 = por %p116, %p117
      %p119 = scmp.ne.s32.totalorder %s111, %s113
      %p120 = scmp.eq.s32.totalorder %s19, 1
      %p121 = por %p119, %p120
      %p122 = scmp.ne.s32.totalorder %s113, %s114
      %p123 = scmp.eq.s32.totalorder %s19, 0
      %p124 = por %p122, %p123
      %p125 = scmp.ne.s32.totalorder %s113, %s114
      %p126 = scmp.eq.s32.totalorder %s20, 1
      %p127 = por %p125, %p126
      %p129 = scmp.ne.s32.totalorder %s114, %s128
      %p130 = scmp.eq.s32.totalorder %s20, 0
      %p131 = por %p129, %p130
      %s132 = ssub.s32 %s14, %s21
      %p133 = scmp.eq.s32.totalorder %s132, 0
      %s135 = sadd.s32 %s134, 1
      %s136 = scalar_select %p133, %s134, %s135
      %p139 = pneg %p133
      %p140 = scmp.eq.s32.totalorder %s14, 1
      %p141 = por %p139, %p140
      %p142 = scmp.ne.s32.totalorder %s134, %s137
      %p143 = scmp.eq.s32.totalorder %s14, 0
      %p144 = por %p142, %p143
      %p145 = scmp.ne.s32.totalorder %s134, %s137
      %p146 = scmp.eq.s32.totalorder %s19, 1
      %p147 = por %p145, %p146
      %p148 = scmp.ne.s32.totalorder %s137, %s138
      %p149 = scmp.eq.s32.totalorder %s19, 0
      %p150 = por %p148, %p149
      %p151 = scmp.ne.s32.totalorder %s137, %s138
      %p152 = scmp.eq.s32.totalorder %s20, 1
      %p153 = por %p151, %p152
      %p155 = scmp.ne.s32.totalorder %s138, %s154
      %p156 = scmp.eq.s32.totalorder %s20, 0
      %p157 = por %p155, %p156
      %p158 = scmp.le.s32.totalorder 1, %s14
      %p159 = scmp.lt.s32.totalorder %s14, 3
      %p160 = pnand %p158, %p159
      %p161 = pneg %p160
      // Predicated region
      $region9: #{tpu_custom_call.1} parent=5 // pred_check
        _
      $region10: #{tpu_custom_call.1} parent=5 // pred_check_branch
        %163 = sbr.rel (%p160) target = $region12
      $region11: #{tpu_custom_call.1} parent=5 // pred_region
        %s164 = ssub.s32 %s14, 1
        // Predicated region
        $region13: #{tpu_custom_call.1} parent=11 // pred_check
          %p165 = pneg %p61
        $region14: #{tpu_custom_call.1} parent=11 // pred_check_branch
          %167 = sbr.rel (%p165) target = $region16
        $region15: #{tpu_custom_call.1} parent=11 // pred_region
          _
        $region16: #{tpu_custom_call.1} parent=11 // pred_fallthru
          _
        // Predicated region
        $region17: #{tpu_custom_call.1} parent=11 // pred_check
          %p168 = pneg %p82
        $region18: #{tpu_custom_call.1} parent=11 // pred_check_branch
          %170 = sbr.rel (%p168) target = $region20
        $region19: #{tpu_custom_call.1} parent=11 // pred_region
          _
        $region20: #{tpu_custom_call.1} parent=11 // pred_fallthru
          _
        // Predicated region
        $region21: #{tpu_custom_call.1} parent=11 // pred_check
          %p171 = pneg %p103
        $region22: #{tpu_custom_call.1} parent=11 // pred_check_branch
          %173 = sbr.rel (%p171) target = $region24
        $region23: #{tpu_custom_call.1} parent=11 // pred_region
          _
        $region24: #{tpu_custom_call.1} parent=11 // pred_fallthru
          _
        // Predicated region
        $region25: #{tpu_custom_call.1} parent=11 // pred_check
          %p174 = pneg %p124
        $region26: #{tpu_custom_call.1} parent=11 // pred_check_branch
          %176 = sbr.rel (%p174) target = $region28
        $region27: #{tpu_custom_call.1} parent=11 // pred_region
          _
        $region28: #{tpu_custom_call.1} parent=11 // pred_fallthru
          _
      $region12: #{tpu_custom_call.1} parent=5 // pred_fallthru
        _
      %p177 = scmp.lt.s32.totalorder %s14, 2
      // Predicated region
      $region29: #{tpu_custom_call.1} parent=5 // pred_check
        %p178 = pneg %p177
      $region30: #{tpu_custom_call.1} parent=5 // pred_check_branch
        %180 = sbr.rel (%p178) target = $region32
      $region31: #{tpu_custom_call.1} parent=5 // pred_region
        // Predicated region
        $region33: #{tpu_custom_call.1} parent=31 // pred_check
          %p181 = pneg %p34
        $region34: #{tpu_custom_call.1} parent=31 // pred_check_branch
          %183 = sbr.rel (%p181) target = $region36
        $region35: #{tpu_custom_call.1} parent=31 // pred_region
          %p184 = scmp.lt.s32.totalorder %s14, 1
          %s185 = scalar_select %p184, %s14, 1
          %s186 = smul.addr %s185, 2
          %s187 = smul.addr %s186, 8
          %s188 = scalar_lea.vmem %s0, %s187
        $region36: #{tpu_custom_call.1} parent=31 // pred_fallthru
          _
      $region32: #{tpu_custom_call.1} parent=5 // pred_fallthru
        _
      %p189 = scmp.le.s32.totalorder 1, %s14
      %p190 = scmp.lt.s32.totalorder %s14, 3
      %p191 = pnand %p189, %p190
      %p192 = pneg %p191
      // Predicated region
      $region37: #{tpu_custom_call.1} parent=5 // pred_check
        _
      $region38: #{tpu_custom_call.1} parent=5 // pred_check_branch
        %194 = sbr.rel (%p191) target = $region40
      $region39: #{tpu_custom_call.1} parent=5 // pred_region
        %s195 = ssub.s32 %s14, 1
        %p196 = scmp.lt.s32.totalorder %s19, 1
        %s197 = scalar_select %p196, %s19, 1
        %s198 = smul.addr %s197, 2
        %s199 = smul.addr %s198, 8
        %s200 = scalar_lea.vmem %s0, %s199
        %p201 = pneg %p40
        %p202 = pneg %p37
        %p203 = pneg %p61
        %p204 = pneg %p58
        %p205 = pneg %p82
        %p206 = pneg %p79
        %p207 = pneg %p103
        %p208 = pneg %p100
        %p209 = pneg %p124
        %p210 = pneg %p121
        %p211 = pneg %p150
        %p212 = pneg %p147
        %s213 = sand.u32 %s137, 1
        %s214 = scalar_lea.sflag [#allocation3], %s213
        %s215 = sand.u32 %s137, 1
        %s216 = smul.addr %s215, 16
        %s217 = scalar_lea.vmem [#allocation2], %s216
        %p218 = scmp.lt.s32.totalorder %s19, 1
        %s219 = scalar_select %p218, %s19, 1
        %s220 = smul.addr %s219, 2
        %s221 = smul.addr %s220, 8
        %s222 = scalar_lea.vmem %s0, %s221
        %v224 = vld [vmem:[%s222] sm:$0xff]
        %v225 = vld [vmem:[%s222 + $0x8] sm:$0xff]
        %v226 = vpack.c.bf16 %v225, %v224
        %v228 = vshrl.u32 %v226, 16
        %v230 = vrot.slane %v228, 7
        %v231 = vshll.u32 %v226, 16
        %v233 = vor.u32 %v230, %v231
        %vm235 = vcmask 1040384
        %vm236 = vsmask.f32 256
        %vm237 = vmand %vm235, %vm236
        %v238 = vsel %vm237, 0, %v233
        %v239 = vrot.slane %v231, 1
        %v240 = vor.u32 %v228, %v239
        %vm242 = vcmask 1047552
        %vm243 = vsmask.f32 7424
        %vm244 = vmand %vm242, %vm243
        %v245 = vsel %vm244, %v240, 0
        %247 = vrot.lane.b32.xlu0 %v226, 32
        %v248 = vpop.permute.xlu0 %247
        %250 = vrot.lane.b32.xlu0 %v245, 64
        %v251 = vpop.permute.xlu0 %250
        %vm252 = vcmask 261120
        %v255 = vsel %vm252, %v238, %v248
        %vm256 = vcmask 523264
        %v258 = vsel %vm256, %v255, %v251
        %v259 = vld [vmem:[%s1] sm:$0xf]
        %v260 = vld [vmem:[%s1 + $0x4] sm:$0xf]
        %v261 = vld [vmem:[%s1 + $0x8] sm:$0xf]
        %v262 = vld [vmem:[%s1 + $0xc] sm:$0xf]
        %v263 = vld [vmem:[%s1 + $0x10] sm:$0xf]
        %v264 = vld [vmem:[%s1 + $0x14] sm:$0xf]
        %v265 = vld [vmem:[%s1 + $0x18] sm:$0xf]
        %v266 = vld [vmem:[%s1 + $0x1c] sm:$0xf]
        %v267 = vld [vmem:[%s1 + $0x20] sm:$0xf]
        %v268 = vld [vmem:[%s1 + $0x24] sm:$0xf]
        %v269 = vld [vmem:[%s1 + $0x28] sm:$0xf]
        %v270 = vld [vmem:[%s1 + $0x2c] sm:$0xf]
        %v271 = vld [vmem:[%s2] sm:$0x1]
        %v273 = vlaneseq
        %v274 = vshrl.u32 %v273, 7
        %v275 = vsub.s32 0, %v274
        %v276 = vrot.slane %v271, %v275
        %v290 = vunpack.c.l.b16 %v259
        %v291 = vunpack.c.l.b16 %v260
        %v292 = vunpack.c.l.b16 %v261
        %v293 = vunpack.c.l.b16 %v262
        %v294 = vunpack.c.l.b16 %v263
        %v295 = vunpack.c.l.b16 %v264
        %v296 = vunpack.c.l.b16 %v265
        %v297 = vunpack.c.l.b16 %v266
        %v298 = vunpack.c.l.b16 %v267
        %v299 = vunpack.c.l.b16 %v268
        %v300 = vunpack.c.l.b16 %v269
        %v301 = vunpack.c.l.b16 %v270
        %v302 = vpack.c.b16 %v291, %v290
        %v303 = vpack.c.b16 %v293, %v292
        %v304 = vpack.c.b16 %v295, %v294
        %v305 = vpack.c.b16 %v297, %v296
        %v306 = vpack.c.b16 %v299, %v298
        %v307 = vpack.c.b16 %v301, %v300
        %vm314 = vcmask 785408
        %v315 = vsel %vm314, %v258, 0
        %317 = vmatprep.subr.bf16.mxu0 0
        %318 = vmatpush1.bf16.msra.mxu0 %v302
        %319 = vmatprep.subr.bf16.mxu0 0
        %320 = vmatpush1.bf16.msra.mxu0 %v303
        %321 = vmatprep.subr.bf16.mxu0 0
        %322 = vmatpush1.bf16.msra.mxu0 %v304
        %323 = vmatprep.subr.bf16.mxu0 0
        %324 = vmatpush1.bf16.msra.mxu0 %v305
        %325 = vmatprep.subr.bf16.mxu0 0
        %326 = vmatpush1.bf16.msra.mxu0 %v306
        %327 = vmatprep.subr.bf16.mxu0 0
        %328 = vmatpush1.bf16.msra.mxu0 %v307
        %329 = vmatprep.subr.bf16.mxu0 0
        %330 = vmatpush1.bf16.msra.mxu0 0
        %331 = vmatprep.subr.bf16.mxu0 0
        %332 = vmatpush1.bf16.msra.mxu0 0
        %333 = vmatprep.subr.bf16.mxu0 0
        %334 = vmatpush1.bf16.msra.mxu0 0
        %335 = vmatprep.subr.bf16.mxu0 0
        %336 = vmatpush1.bf16.msra.mxu0 0
        %337 = vmatprep.subr.bf16.mxu0 0
        %338 = vmatpush1.bf16.msra.mxu0 0
        %339 = vmatprep.subr.bf16.mxu0 0
        %340 = vmatpush1.bf16.msra.mxu0 0
        %341 = vmatprep.subr.bf16.mxu0 0
        %342 = vmatpush1.bf16.msra.mxu0 0
        %343 = vmatprep.subr.bf16.mxu0 0
        %344 = vmatpush1.bf16.msra.mxu0 0
        %345 = vmatprep.subr.bf16.mxu0 0
        %346 = vmatpush1.bf16.msra.mxu0 0
        %347 = vmatprep.subr.bf16.mxu0 0
        %348 = vmatpush1.bf16.msra.mxu0 0
        %349 = vmatprep.mubr.bf16.mxu0 0
        %350 = vmatmul.mubr.bf16.gmra.mrb[0].mxu0 %v315
        %v351 = vpop.f32.mrb[0].mxu0
        %v352 = vadd.f32 %v276, %v351
        %v353 = vpop.f32.mrb[0].mxu0
        %v354 = vpop.f32.mrb[0].mxu0
        %v355 = vadd.f32 %v276, %v354
        %v356 = vpop.f32.mrb[0].mxu0
        %357 = vdwg.mxu0
        %v358 = vmax.f32 %v352, 0.0
        %v359 = vmax.f32 %v355, 0.0
        %v360 = vpack.c.bf16 %v359, %v358
        %v362 = vshrl.u32 %v360, 16
        %v364 = vrot.slane %v362, 7
        %v365 = vshll.u32 %v360, 16
        %v367 = vor.u32 %v364, %v365
        %v369 = vsel %vm237, 0, %v367
        %v370 = vrot.slane %v365, 1
        %v371 = vor.u32 %v362, %v370
        %v373 = vsel %vm244, %v371, 0
        %375 = vrot.lane.b32.xlu0 %v360, 32
        %v376 = vpop.permute.xlu0 %375
        %378 = vrot.lane.b32.xlu0 %v373, 64
        %v379 = vpop.permute.xlu0 %378
        %v382 = vsel %vm252, %v369, %v376
        %v384 = vsel %vm256, %v382, %v379
        %v385 = vld [vmem:[%s3] sm:$0xf]
        %v386 = vld [vmem:[%s3 + $0x4] sm:$0xf]
        %v387 = vld [vmem:[%s3 + $0x8] sm:$0xf]
        %v388 = vld [vmem:[%s3 + $0xc] sm:$0xf]
        %v389 = vld [vmem:[%s3 + $0x10] sm:$0xf]
        %v390 = vld [vmem:[%s3 + $0x14] sm:$0xf]
        %v391 = vld [vmem:[%s3 + $0x18] sm:$0xf]
        %v392 = vld [vmem:[%s3 + $0x1c] sm:$0xf]
        %v393 = vld [vmem:[%s3 + $0x20] sm:$0xf]
        %v394 = vld [vmem:[%s3 + $0x24] sm:$0xf]
        %v395 = vld [vmem:[%s3 + $0x28] sm:$0xf]
        %v396 = vld [vmem:[%s3 + $0x2c] sm:$0xf]
        %v397 = vld [vmem:[%s4] sm:$0x1]
        %v399 = vlaneseq
        %v400 = vshrl.u32 %v399, 7
        %v401 = vsub.s32 0, %v400
        %v402 = vrot.slane %v397, %v401
        %v416 = vunpack.c.l.b16 %v385
        %v417 = vunpack.c.l.b16 %v386
        %v418 = vunpack.c.l.b16 %v387
        %v419 = vunpack.c.l.b16 %v388
        %v420 = vunpack.c.l.b16 %v389
        %v421 = vunpack.c.l.b16 %v390
        %v422 = vunpack.c.l.b16 %v391
        %v423 = vunpack.c.l.b16 %v392
        %v424 = vunpack.c.l.b16 %v393
        %v425 = vunpack.c.l.b16 %v394
        %v426 = vunpack.c.l.b16 %v395
        %v427 = vunpack.c.l.b16 %v396
        %v428 = vpack.c.b16 %v417, %v416
        %v429 = vpack.c.b16 %v419, %v418
        %v430 = vpack.c.b16 %v421, %v420
        %v431 = vpack.c.b16 %v423, %v422
        %v432 = vpack.c.b16 %v425, %v424
        %v433 = vpack.c.b16 %v427, %v426
        %v440 = vsel %vm314, %v384, 0
        %442 = vmatprep.subr.bf16.mxu0 0
        %443 = vmatpush1.bf16.msra.mxu0 %v428
        %444 = vmatprep.subr.bf16.mxu0 0
        %445 = vmatpush1.bf16.msra.mxu0 %v429
        %446 = vmatprep.subr.bf16.mxu0 0
        %447 = vmatpush1.bf16.msra.mxu0 %v430
        %448 = vmatprep.subr.bf16.mxu0 0
        %449 = vmatpush1.bf16.msra.mxu0 %v431
        %450 = vmatprep.subr.bf16.mxu0 0
        %451 = vmatpush1.bf16.msra.mxu0 %v432
        %452 = vmatprep.subr.bf16.mxu0 0
        %453 = vmatpush1.bf16.msra.mxu0 %v433
        %454 = vmatprep.subr.bf16.mxu0 0
        %455 = vmatpush1.bf16.msra.mxu0 0
        %456 = vmatprep.subr.bf16.mxu0 0
        %457 = vmatpush1.bf16.msra.mxu0 0
        %458 = vmatprep.subr.bf16.mxu0 0
        %459 = vmatpush1.bf16.msra.mxu0 0
        %460 = vmatprep.subr.bf16.mxu0 0
        %461 = vmatpush1.bf16.msra.mxu0 0
        %462 = vmatprep.subr.bf16.mxu0 0
        %463 = vmatpush1.bf16.msra.mxu0 0
        %464 = vmatprep.subr.bf16.mxu0 0
        %465 = vmatpush1.bf16.msra.mxu0 0
        %466 = vmatprep.subr.bf16.mxu0 0
        %467 = vmatpush1.bf16.msra.mxu0 0
        %468 = vmatprep.subr.bf16.mxu0 0
        %469 = vmatpush1.bf16.msra.mxu0 0
        %470 = vmatprep.subr.bf16.mxu0 0
        %471 = vmatpush1.bf16.msra.mxu0 0
        %472 = vmatprep.subr.bf16.mxu0 0
        %473 = vmatpush1.bf16.msra.mxu0 0
        %474 = vmatprep.mubr.bf16.mxu0 0
        %475 = vmatmul.mubr.bf16.gmra.mrb[0].mxu0 %v440
        %v476 = vpop.f32.mrb[0].mxu0
        %v477 = vadd.f32 %v402, %v476
        %v478 = vpop.f32.mrb[0].mxu0
        %v479 = vpop.f32.mrb[0].mxu0
        %v480 = vadd.f32 %v402, %v479
        %v481 = vpop.f32.mrb[0].mxu0
        %482 = vdwg.mxu0
        %v483 = vadd.f32 %v477, %v224
        %v484 = vadd.f32 %v480, %v225
        %v485 = vmax.f32 %v483, 0.0
        %v486 = vmax.f32 %v484, 0.0
        %v487 = vpack.c.bf16 %v486, %v485
        %v489 = vshrl.u32 %v487, 16
        %v491 = vrot.slane %v489, 7
        %v492 = vshll.u32 %v487, 16
        %v494 = vor.u32 %v491, %v492
        %v496 = vsel %vm237, 0, %v494
        %v497 = vrot.slane %v492, 1
        %v498 = vor.u32 %v489, %v497
        %v500 = vsel %vm244, %v498, 0
        %502 = vrot.lane.b32.xlu0 %v487, 32
        %v503 = vpop.permute.xlu0 %502
        %505 = vrot.lane.b32.xlu0 %v500, 64
        %v506 = vpop.permute.xlu0 %505
        %v509 = vsel %vm252, %v496, %v503
        %v511 = vsel %vm256, %v509, %v506
        %s512 = scalar_lea.vmem %s1, 48
        %v513 = vld [vmem:[%s512] sm:$0xf]
        %v514 = vld [vmem:[%s512 + $0x4] sm:$0xf]
        %v515 = vld [vmem:[%s512 + $0x8] sm:$0xf]
        %v516 = vld [vmem:[%s512 + $0xc] sm:$0xf]
        %v517 = vld [vmem:[%s512 + $0x10] sm:$0xf]
        %v518 = vld [vmem:[%s512 + $0x14] sm:$0xf]
        %v519 = vld [vmem:[%s512 + $0x18] sm:$0xf]
        %v520 = vld [vmem:[%s512 + $0x1c] sm:$0xf]
        %v521 = vld [vmem:[%s512 + $0x20] sm:$0xf]
        %v522 = vld [vmem:[%s512 + $0x24] sm:$0xf]
        %v523 = vld [vmem:[%s512 + $0x28] sm:$0xf]
        %v524 = vld [vmem:[%s512 + $0x2c] sm:$0xf]
        %s525 = scalar_lea.vmem %s2, 1
        %v526 = vld [vmem:[%s525] sm:$0x1]
        %v528 = vlaneseq
        %v529 = vshrl.u32 %v528, 7
        %v530 = vsub.s32 0, %v529
        %v531 = vrot.slane %v526, %v530
        %v545 = vunpack.c.l.b16 %v513
        %v546 = vunpack.c.l.b16 %v514
        %v547 = vunpack.c.l.b16 %v515
        %v548 = vunpack.c.l.b16 %v516
        %v549 = vunpack.c.l.b16 %v517
        %v550 = vunpack.c.l.b16 %v518
        %v551 = vunpack.c.l.b16 %v519
        %v552 = vunpack.c.l.b16 %v520
        %v553 = vunpack.c.l.b16 %v521
        %v554 = vunpack.c.l.b16 %v522
        %v555 = vunpack.c.l.b16 %v523
        %v556 = vunpack.c.l.b16 %v524
        %v557 = vpack.c.b16 %v546, %v545
        %v558 = vpack.c.b16 %v548, %v547
        %v559 = vpack.c.b16 %v550, %v549
        %v560 = vpack.c.b16 %v552, %v551
        %v561 = vpack.c.b16 %v554, %v553
        %v562 = vpack.c.b16 %v556, %v555
        %v569 = vsel %vm314, %v511, 0
        %571 = vmatprep.subr.bf16.mxu0 0
        %572 = vmatpush1.bf16.msra.mxu0 %v557
        %573 = vmatprep.subr.bf16.mxu0 0
        %574 = vmatpush1.bf16.msra.mxu0 %v558
        %575 = vmatprep.subr.bf16.mxu0 0
        %576 = vmatpush1.bf16.msra.mxu0 %v559
        %577 = vmatprep.subr.bf16.mxu0 0
        %578 = vmatpush1.bf16.msra.mxu0 %v560
        %579 = vmatprep.subr.bf16.mxu0 0
        %580 = vmatpush1.bf16.msra.mxu0 %v561
        %581 = vmatprep.subr.bf16.mxu0 0
        %582 = vmatpush1.bf16.msra.mxu0 %v562
        %583 = vmatprep.subr.bf16.mxu0 0
        %584 = vmatpush1.bf16.msra.mxu0 0
        %585 = vmatprep.subr.bf16.mxu0 0
        %586 = vmatpush1.bf16.msra.mxu0 0
        %587 = vmatprep.subr.bf16.mxu0 0
        %588 = vmatpush1.bf16.msra.mxu0 0
        %589 = vmatprep.subr.bf16.mxu0 0
        %590 = vmatpush1.bf16.msra.mxu0 0
        %591 = vmatprep.subr.bf16.mxu0 0
        %592 = vmatpush1.bf16.msra.mxu0 0
        %593 = vmatprep.subr.bf16.mxu0 0
        %594 = vmatpush1.bf16.msra.mxu0 0
        %595 = vmatprep.subr.bf16.mxu0 0
        %596 = vmatpush1.bf16.msra.mxu0 0
        %597 = vmatprep.subr.bf16.mxu0 0
        %598 = vmatpush1.bf16.msra.mxu0 0
        %599 = vmatprep.subr.bf16.mxu0 0
        %600 = vmatpush1.bf16.msra.mxu0 0
        %601 = vmatprep.subr.bf16.mxu0 0
        %602 = vmatpush1.bf16.msra.mxu0 0
        %603 = vmatprep.mubr.bf16.mxu0 0
        %604 = vmatmul.mubr.bf16.gmra.mrb[0].mxu0 %v569
        %v605 = vpop.f32.mrb[0].mxu0
        %v606 = vadd.f32 %v531, %v605
        %v607 = vpop.f32.mrb[0].mxu0
        %v608 = vpop.f32.mrb[0].mxu0
        %v609 = vadd.f32 %v531, %v608
        %v610 = vpop.f32.mrb[0].mxu0
        %611 = vdwg.mxu0
        %v612 = vmax.f32 %v606, 0.0
        %v613 = vmax.f32 %v609, 0.0
        %v614 = vpack.c.bf16 %v613, %v612
        %v616 = vshrl.u32 %v614, 16
        %v618 = vrot.slane %v616, 7
        %v619 = vshll.u32 %v614, 16
        %v621 = vor.u32 %v618, %v619
        %v623 = vsel %vm237, 0, %v621
        %v624 = vrot.slane %v619, 1
        %v625 = vor.u32 %v616, %v624
        %v627 = vsel %vm244, %v625, 0
        %629 = vrot.lane.b32.xlu0 %v614, 32
        %v630 = vpop.permute.xlu0 %629
        %632 = vrot.lane.b32.xlu0 %v627, 64
        %v633 = vpop.permute.xlu0 %632
        %v636 = vsel %vm252, %v623, %v630
        %v638 = vsel %vm256, %v636, %v633
        %s639 = scalar_lea.vmem %s3, 48
        %v640 = vld [vmem:[%s639] sm:$0xf]
        %v641 = vld [vmem:[%s639 + $0x4] sm:$0xf]
        %v642 = vld [vmem:[%s639 + $0x8] sm:$0xf]
        %v643 = vld [vmem:[%s639 + $0xc] sm:$0xf]
        %v644 = vld [vmem:[%s639 + $0x10] sm:$0xf]
        %v645 = vld [vmem:[%s639 + $0x14] sm:$0xf]
        %v646 = vld [vmem:[%s639 + $0x18] sm:$0xf]
        %v647 = vld [vmem:[%s639 + $0x1c] sm:$0xf]
        %v648 = vld [vmem:[%s639 + $0x20] sm:$0xf]
        %v649 = vld [vmem:[%s639 + $0x24] sm:$0xf]
        %v650 = vld [vmem:[%s639 + $0x28] sm:$0xf]
        %v651 = vld [vmem:[%s639 + $0x2c] sm:$0xf]
        %s652 = scalar_lea.vmem %s4, 1
        %v653 = vld [vmem:[%s652] sm:$0x1]
        %v655 = vlaneseq
        %v656 = vshrl.u32 %v655, 7
        %v657 = vsub.s32 0, %v656
        %v658 = vrot.slane %v653, %v657
        %v672 = vunpack.c.l.b16 %v640
        %v673 = vunpack.c.l.b16 %v641
        %v674 = vunpack.c.l.b16 %v642
        %v675 = vunpack.c.l.b16 %v643
        %v676 = vunpack.c.l.b16 %v644
        %v677 = vunpack.c.l.b16 %v645
        %v678 = vunpack.c.l.b16 %v646
        %v679 = vunpack.c.l.b16 %v647
        %v680 = vunpack.c.l.b16 %v648
        %v681 = vunpack.c.l.b16 %v649
        %v682 = vunpack.c.l.b16 %v650
        %v683 = vunpack.c.l.b16 %v651
        %v684 = vpack.c.b16 %v673, %v672
        %v685 = vpack.c.b16 %v675, %v674
        %v686 = vpack.c.b16 %v677, %v676
        %v687 = vpack.c.b16 %v679, %v678
        %v688 = vpack.c.b16 %v681, %v680
        %v689 = vpack.c.b16 %v683, %v682
        %v696 = vsel %vm314, %v638, 0
        %698 = vmatprep.subr.bf16.mxu0 0
        %699 = vmatpush1.bf16.msra.mxu0 %v684
        %700 = vmatprep.subr.bf16.mxu0 0
        %701 = vmatpush1.bf16.msra.mxu0 %v685
        %702 = vmatprep.subr.bf16.mxu0 0
        %703 = vmatpush1.bf16.msra.mxu0 %v686
        %704 = vmatprep.subr.bf16.mxu0 0
        %705 = vmatpush1.bf16.msra.mxu0 %v687
        %706 = vmatprep.subr.bf16.mxu0 0
        %707 = vmatpush1.bf16.msra.mxu0 %v688
        %708 = vmatprep.subr.bf16.mxu0 0
        %709 = vmatpush1.bf16.msra.mxu0 %v689
        %710 = vmatprep.subr.bf16.mxu0 0
        %711 = vmatpush1.bf16.msra.mxu0 0
        %712 = vmatprep.subr.bf16.mxu0 0
        %713 = vmatpush1.bf16.msra.mxu0 0
        %714 = vmatprep.subr.bf16.mxu0 0
        %715 = vmatpush1.bf16.msra.mxu0 0
        %716 = vmatprep.subr.bf16.mxu0 0
        %717 = vmatpush1.bf16.msra.mxu0 0
        %718 = vmatprep.subr.bf16.mxu0 0
        %719 = vmatpush1.bf16.msra.mxu0 0
        %720 = vmatprep.subr.bf16.mxu0 0
        %721 = vmatpush1.bf16.msra.mxu0 0
        %722 = vmatprep.subr.bf16.mxu0 0
        %723 = vmatpush1.bf16.msra.mxu0 0
        %724 = vmatprep.subr.bf16.mxu0 0
        %725 = vmatpush1.bf16.msra.mxu0 0
        %726 = vmatprep.subr.bf16.mxu0 0
        %727 = vmatpush1.bf16.msra.mxu0 0
        %728 = vmatprep.subr.bf16.mxu0 0
        %729 = vmatpush1.bf16.msra.mxu0 0
        %730 = vmatprep.mubr.bf16.mxu0 0
        %731 = vmatmul.mubr.bf16.gmra.mrb[0].mxu0 %v696
        %v732 = vpop.f32.mrb[0].mxu0
        %v733 = vadd.f32 %v658, %v732
        %v734 = vpop.f32.mrb[0].mxu0
        %v735 = vpop.f32.mrb[0].mxu0
        %v736 = vadd.f32 %v658, %v735
        %v737 = vpop.f32.mrb[0].mxu0
        %738 = vdwg.mxu0
        %v739 = vadd.f32 %v733, %v485
        %v740 = vadd.f32 %v736, %v486
        %v741 = vmax.f32 %v739, 0.0
        %v742 = vmax.f32 %v740, 0.0
        %743 = vst.msk [vmem:[%s217] sm:$0xff] %vm252, %v741
        %744 = vst.msk [vmem:[%s217 + $0x8] sm:$0xff] %vm252, %v742
        %s745 = sand.u32 %s137, 1
        %s746 = scalar_lea.sflag [#allocation3], %s745
        %s747 = sand.u32 %s137, 1
        %s748 = smul.addr %s747, 16
        %s749 = scalar_lea.vmem [#allocation2], %s748
        // Predicated region
        $region41: #{tpu_custom_call.1} parent=39 // pred_check
          %p750 = pneg %p147
        $region42: #{tpu_custom_call.1} parent=39 // pred_check_branch
          %752 = sbr.rel (%p750) target = $region44
        $region43: #{tpu_custom_call.1} parent=39 // pred_region
          %s754 = ssub.s32 256, 256
          %755 = vsyncadd %s746, %s754
          %s756 = smul.addr %s19, 2
          %s757 = smul.addr %s756, 128
          %s758 = scalar_lea.hbm %s5, %s757
          %s759 = sshll.u32 %s749, 4
          %s760 = int_to_ptr.vmem [resolvable:$true] %s759
          %765 = dma.vmem_to_hbm [thread:$0]  %s760, 256, %s758, %s746, 128, 128, 8
        $region44: #{tpu_custom_call.1} parent=39 // pred_fallthru
          _
      $region40: #{tpu_custom_call.1} parent=5 // pred_fallthru
        _
      %p766 = scmp.le.s32.totalorder 2, %s14
      // Predicated region
      $region45: #{tpu_custom_call.1} parent=5 // pred_check
        %p767 = pneg %p766
      $region46: #{tpu_custom_call.1} parent=5 // pred_check_branch
        %769 = sbr.rel (%p767) target = $region48
      $region47: #{tpu_custom_call.1} parent=5 // pred_region
        %s770 = ssub.s32 %s14, 2
        // Predicated region
        $region49: #{tpu_custom_call.1} parent=47 // pred_check
          %p771 = pneg %p153
        $region50: #{tpu_custom_call.1} parent=47 // pred_check_branch
          %773 = sbr.rel (%p771) target = $region52
        $region51: #{tpu_custom_call.1} parent=47 // pred_region
          %s774 = sand.u32 %s138, 1
          %s775 = scalar_lea.sflag [#allocation3], %s774
          %s776 = sand.u32 %s138, 1
          %s777 = smul.addr %s776, 16
          %s778 = scalar_lea.vmem [#allocation2], %s777
          %779 = dma.done %s775, 256
        $region52: #{tpu_custom_call.1} parent=47 // pred_fallthru
          _
      $region48: #{tpu_custom_call.1} parent=5 // pred_fallthru
        _
    $region6: #{tpu_custom_call.1} parent=1 // loop_footer
      %s18 = sadd.s32 1, %s14
    $region7: #{tpu_custom_call.1} parent=1 // loop_footer_branch
      %13 = sbr.rel target = $region3
    $region8: #{tpu_custom_call.1} parent=1 // loop_exit
      _
    %780 = vsyncpa [#allocation3], 1
    %s781 = scalar_lea.sflag [#allocation3], 1
    %782 = vsyncpa %s781, 1

</llo_original>
